<compile_context>
chip_gen: v5e
topology: v5e:2x2
jax: 0.10.0
libtpu: 0.0.40
codegen_flags: <defaults>
</compile_context>

<pallas_src>
import functools
import math

import jax
import jax.numpy as jnp
from jax.experimental import pallas as pl
from jax.experimental.pallas import tpu as pltpu


def _flatten_dma_kernel(x_hbm, o_hbm, sem):
    # Whole-array HBM -> HBM copy.  Flatten has no arithmetic, so the minimal
    # out-of-place kernel is a single DMA; src and dst have identical
    # shape/dtype/layout so the copy is a straight byte move.
    cp = pltpu.make_async_copy(x_hbm, o_hbm, sem)
    cp.start()
    cp.wait()


@functools.partial(jax.jit, static_argnames=("skip_kernel",))
def flatten_pallas(x: jax.Array, skip_kernel: bool = False) -> jax.Array:
    """Equivalent of torch Flatten: (N, ...) -> (N, prod(...))."""
    n = x.shape[0]
    d = math.prod(x.shape[1:]) if x.ndim > 1 else 1

    # Row-major flatten of trailing dims (pure metadata reshape in XLA);
    # matches torch .view(N, -1) on contiguous NCHW input.
    x2d = x.reshape(n, d)

    if skip_kernel:
        # Fast path: Flatten is metadata-only; no kernel, no HBM traffic.
        return x2d

    itemsize = jnp.dtype(x.dtype).itemsize
    return pl.pallas_call(
        _flatten_dma_kernel,
        out_shape=jax.ShapeDtypeStruct((n, d), x.dtype),
        in_specs=[pl.BlockSpec(memory_space=pl.ANY)],
        out_specs=pl.BlockSpec(memory_space=pl.ANY),
        scratch_shapes=[pltpu.SemaphoreType.DMA],
        cost_estimate=pl.CostEstimate(
            flops=0,
            transcendentals=0,
            bytes_accessed=2 * n * d * itemsize,
        ),
    )(x2d)


if __name__ == "__main__":
    key = jax.random.PRNGKey(0)
    # Small NCHW input consistent with a conv feature map.
    x = jax.random.normal(key, (2, 4, 16, 16), dtype=jnp.float32)

    # Reference: plain JAX reshape (== torch .view(N, -1) on contiguous NCHW).
    ref = x.reshape(x.shape[0], -1)

    out = flatten_pallas(x)
    jax.block_until_ready(out)

    assert out.shape == (2, 4 * 16 * 16), out.shape
    assert out.dtype == x.dtype
    assert bool(jnp.array_equal(out, ref))

    # Fast path (no kernel launch) must agree too.
    out_fast = flatten_pallas(x, skip_kernel=True)
    jax.block_until_ready(out_fast)
    assert bool(jnp.array_equal(out_fast, ref))

    print("KERNEL_OK")
</pallas_src>

<mosaic_0001>
module attributes {stable_mosaic.version = 11 : i64} {
  func.func @_flatten_dma_kernel(%arg0: memref<2x1024xf32, #tpu.memory_space<any>>, %arg1: memref<2x1024xf32, #tpu.memory_space<any>>, %arg2: memref<!tpu.dma_semaphore, #tpu.memory_space<semaphore_mem>>) attributes {dimension_semantics = [], scalar_prefetch = 0 : i64, scratch_operands = 1 : i64, tpu.core_type = #tpu.core_type<tc>} {
    tpu.enqueue_dma source(%arg0 : memref<2x1024xf32, #tpu.memory_space<any>>) target(%arg1 : memref<2x1024xf32, #tpu.memory_space<any>>) target_semaphore(%arg2 : memref<!tpu.dma_semaphore, #tpu.memory_space<semaphore_mem>>)
    tpu.wait_dma2 semaphore(%arg2 : memref<!tpu.dma_semaphore, #tpu.memory_space<semaphore_mem>>) src(%arg0 : memref<2x1024xf32, #tpu.memory_space<any>>) dst(%arg1 : memref<2x1024xf32, #tpu.memory_space<any>>)
    return
  }
}

</mosaic_0001>

<llo_original>
// kernel: flatten_pallas.1
$region0: #{flatten_pallas.1}
  #allocation0 [shape = 'u32[]', space=smem, size = 0x4, offset = 0x4, fixed_abs, tag = 'smem constant byte address 0x4 - core index']
  #allocation1 [shape = 'u32[72,128]{1,0:T(1,128)}', space=vmem, size = 0x9000, scoped, tag = 'internal scratch']
  #allocation2 [shape = 's32[1]{0}', space=sflag, size = 0x4, scoped, tag = 'scratch operand']
  #allocation3 [shape = 's32[]', space=sflag, size = 0x4, offset = 0, fixed_abs, tag = 'sflag constant byte address 0x0 - dummy sync flag']
  #allocation4 [shape = 's32[]', space=sflag, size = 0x4, offset = 0, fixed_abs, tag = 'sflag constant byte address 0x0 - dummy sync flag']
  #allocation5 [shape = 'u32[]', space=smem, size = 0x4, offset = 0x44, fixed_abs, tag = 'smem constant byte address 0x44 - assertion arg 0']
  #allocation6 [shape = 'u32[]', space=smem, size = 0x4, offset = 0x48, fixed_abs, tag = 'smem constant byte address 0x48 - assertion arg 1']
  %s0 = inlined_call_operand.vmem [shape: f32[2,1024], index: 0, kind: input, shape index: {}]
  %s1 = inlined_call_operand.hbm [shape: f32[2,1024], index: 1, kind: output, shape index: {}]
  %s2 = sld [smem:[#allocation0]]
  $region6: #{flatten_pallas.1} parent=0
    _
  %s4 = ssub.s32 1, %s2
  %s5 = scalar_select 0, %s4, %s2
  // Predicated region
  $region2: #{flatten_pallas.1} parent=0 // pred_check
    _
  $region3: #{flatten_pallas.1} parent=0 // pred_check_branch
    %7 = sbr.rel target = $region5
  $region4: #{flatten_pallas.1} parent=0 // pred_region
    %8 = sst [smem:[#allocation5]] [#allocation4]
    %9 = sst [smem:[#allocation6]] [#allocation3]
  $region5: #{flatten_pallas.1} parent=0 // pred_fallthru
    _
  %11 = shalt.err (0)
  %s13 = sshll.u32 %s0, 4
  %s14 = int_to_ptr.vmem [resolvable:$true] %s13
  %s15 = sshll.u32 %s1, 4
  %s16 = int_to_ptr.hbm [resolvable:$true] %s15
  %18 = dma.vmem_to_hbm [thread:$0]  %s14, 256, %s16, [#allocation2]
  %s19 = smul.u32 2, 1
  %s20 = smul.u32 %s19, 8
  %s21 = sshll.u32 %s20, 4
  %22 = dma.done [#allocation2], %s21
  %23 = vsyncmov [#allocation2]
  %s24 = vpop.sfrf %23
  %p25 = scmp.eq.s32.totalorder %s24, 0
  %p26 = pneg %p25
  %28 = shalt.err (%p26)

</llo_original>
